<compile_context>
chip_gen: v5e
topology: v5e:2x2
jax: 0.10.0
libtpu: 0.0.40
codegen_flags: <defaults>
</compile_context>

<pallas_src>
import functools

import jax
import jax.numpy as jnp
from jax.experimental import pallas as pl
from jax.experimental.pallas import tpu as pltpu

_N_HEADS = 3    # policy0, policy1, value
_N_POLICY = 2   # first two heads get a softmax
_NEG_PAD = -1e30


def _round_up(x, m):
    return ((x + m - 1) // m) * m


def _nn_kernel(x_ref, w1_ref, b1_ref, w2_ref, b2_ref, w3_ref, b3_ref, o_ref):
    """One grid step = one batch tile, ALL three heads unrolled.

    x_ref : (3, tm, in)        w1_ref: (3, in, l1)   b1_ref: (3, 1, l1)
    w2_ref: (3, l1, l2)        b2_ref: (3, 1, l2)
    w3_ref: (3, l2, out_lanes) b3_ref: (3, 1, out_lanes)   (lane-shifted + padded)
    o_ref : (tm, out_lanes)    packed: [softmax0 | softmax1 | value | zeros]
    """
    acc = jnp.zeros(o_ref.shape, jnp.float32)

    for h in range(_N_HEADS):                                  # static unroll
        x = x_ref[h]                                           # (tm, in)
        h1 = jnp.dot(x, w1_ref[h], preferred_element_type=jnp.float32) + b1_ref[h]
        h1 = jnp.maximum(h1, 0.0)
        h2 = jnp.dot(h1, w2_ref[h], preferred_element_type=jnp.float32) + b2_ref[h]
        h2 = jnp.maximum(h2, 0.0)
        # w3/b3 are pre-shifted into this head's lane range; policy pad bias = -1e30.
        logits = jnp.dot(h2, w3_ref[h], preferred_element_type=jnp.float32) + b3_ref[h]

        if h < _N_POLICY:
            m = jnp.max(logits, axis=-1, keepdims=True)
            e = jnp.exp(logits - m)            # padded lanes underflow to exactly 0
            denom = jnp.sum(e, axis=-1, keepdims=True)
            acc = acc + e * pl.reciprocal(denom, approx=True)
        else:
            acc = acc + logits                 # value head: pad lanes are exactly 0

    o_ref[...] = acc


@jax.jit
def nn_forward_stacked(fused_params, xstack):
    """Core entry point: xstack is (3, batch, in) = [x1, x2, xs] pre-stacked.

    Returns the packed (batch, out_lanes) slab:
      lanes [0:out)        softmax(policy0(x1))
      lanes [out:2*out)    softmax(policy1(x2))
      lane  [2*out]        value(xs)
    """
    w1s, b1s, w2s, b2s, w3s, b3s = fused_params
    _, batch, in_dim = xstack.shape
    l1 = w1s.shape[-1]
    l2 = w2s.shape[-1]
    out_lanes = w3s.shape[-1]

    # Fixed, bounded batch tile (multiple of 8); pad batch up to a tile multiple.
    if batch >= 512:
        tm = 512
    elif batch >= 128:
        tm = 128
    else:
        tm = _round_up(batch, 8)
    padded_batch = _round_up(batch, tm)
    if padded_batch != batch:
        xstack = jnp.pad(xstack, ((0, 0), (0, padded_batch - batch), (0, 0)))
    n_bt = padded_batch // tm

    out = pl.pallas_call(
        _nn_kernel,
        out_shape=jax.ShapeDtypeStruct((padded_batch, out_lanes), jnp.float32),
        grid_spec=pltpu.PrefetchScalarGridSpec(
            num_scalar_prefetch=0,
            grid=(n_bt,),
            in_specs=[
                pl.BlockSpec((_N_HEADS, tm, in_dim),    lambda m: (0, m, 0)),  # x
                pl.BlockSpec((_N_HEADS, in_dim, l1),    lambda m: (0, 0, 0)),  # w1
                pl.BlockSpec((_N_HEADS, 1, l1),         lambda m: (0, 0, 0)),  # b1
                pl.BlockSpec((_N_HEADS, l1, l2),        lambda m: (0, 0, 0)),  # w2
                pl.BlockSpec((_N_HEADS, 1, l2),         lambda m: (0, 0, 0)),  # b2
                pl.BlockSpec((_N_HEADS, l2, out_lanes), lambda m: (0, 0, 0)),  # w3 (shifted+padded)
                pl.BlockSpec((_N_HEADS, 1, out_lanes),  lambda m: (0, 0, 0)),  # b3 (shifted+padded)
            ],
            out_specs=pl.BlockSpec((tm, out_lanes), lambda m: (m, 0)),
        ),
        compiler_params=pltpu.CompilerParams(
            dimension_semantics=("parallel",)),
    )(xstack, w1s, b1s, w2s, b2s, w3s, b3s)
    return out


@functools.partial(jax.jit, static_argnames=("output_size",))
def nn_forward(fused_params, x1, x2, xs, *, output_size):
    """Equivalent of NN.forward: (softmax(policy0(x1)), softmax(policy1(x2)), value(xs))."""
    batch = x1.shape[0]
    # For large batches, prefer passing a pre-stacked (3,B,in) array to
    # nn_forward_stacked to avoid this extra HBM copy.
    xstack = jnp.stack([x1, x2, xs], axis=0)
    out = nn_forward_stacked(fused_params, xstack)
    a_dist0 = out[:batch, :output_size]
    a_dist1 = out[:batch, output_size:2 * output_size]
    value = out[:batch, 2 * output_size:2 * output_size + 1]
    return a_dist0, a_dist1, value


# ----------------------------- parameter handling -----------------------------

def init_linear_params(key, in_features, out_features):
    """Deterministic init mimicking PyTorch nn.Linear default (uniform +-1/sqrt(fan_in)).
    Weight stored as (in_features, out_features) — transposed vs PyTorch."""
    kw, kb = jax.random.split(key)
    bound = 1.0 / jnp.sqrt(jnp.float32(in_features))
    w = jax.random.uniform(kw, (in_features, out_features), jnp.float32, -bound, bound)
    b = jax.random.uniform(kb, (1, out_features), jnp.float32, -bound, bound)
    return w, b


def init_head_params(key, input_size, layer1_size, layer2_size, output_size):
    k1, k2, k3 = jax.random.split(key, 3)
    w1, b1 = init_linear_params(k1, input_size, layer1_size)
    w2, b2 = init_linear_params(k2, layer1_size, layer2_size)
    w3, b3 = init_linear_params(k3, layer2_size, output_size)
    return (w1, b1, w2, b2, w3, b3)


def init_nn_params(key, input_size, layer1_size, layer2_size, output_size):
    k0, k1, kv = jax.random.split(key, 3)
    return {
        "policy0": init_head_params(k0, input_size, layer1_size, layer2_size, output_size),
        "policy1": init_head_params(k1, input_size, layer1_size, layer2_size, 1 * output_size),
        "value":   init_head_params(kv, input_size, layer1_size, layer2_size, 1),
    }


def fuse_nn_params(params, output_size):
    """Stack per-head params into (3, in, out) tensors.

    The last layer is zero-padded to a 128-multiple lane width, with each head's
    real columns SHIFTED into its own lane range:
        policy0 -> [0, out)   policy1 -> [out, 2*out)   value -> [2*out, 2*out+1)
    Padded bias lanes of the policy heads are set to -1e30 (so softmax ignores
    them with no in-kernel masking); the value head's padded bias lanes are 0.
    """
    heads = (params["policy0"], params["policy1"], params["value"])
    out_lanes = _round_up(2 * output_size + 1, 128)
    offsets = (0, output_size, 2 * output_size)
    pad_bias = (_NEG_PAD, _NEG_PAD, 0.0)

    w3s, b3s = [], []
    for (w1, b1, w2, b2, w3, b3), off, padv in zip(heads, offsets, pad_bias):
        l2, width = w3.shape
        w3p = jnp.zeros((l2, out_lanes), jnp.float32).at[:, off:off + width].set(w3)
        b3p = jnp.full((1, out_lanes), padv, jnp.float32).at[:, off:off + width].set(b3)
        w3s.append(w3p)
        b3s.append(b3p)

    w1s = jnp.stack([h[0] for h in heads])
    b1s = jnp.stack([h[1] for h in heads])
    w2s = jnp.stack([h[2] for h in heads])
    b2s = jnp.stack([h[3] for h in heads])
    return (w1s, b1s, w2s, b2s, jnp.stack(w3s), jnp.stack(b3s))


def _reference_head(x, params, apply_softmax):
    w1, b1, w2, b2, w3, b3 = params
    h1 = jnp.maximum(x @ w1 + b1, 0.0)
    h2 = jnp.maximum(h1 @ w2 + b2, 0.0)
    logits = h2 @ w3 + b3
    if apply_softmax:
        return jax.nn.softmax(logits, axis=-1)
    return logits


if __name__ == "__main__":
    input_size, layer1_size, layer2_size, output_size = 32, 64, 32, 8
    batch = 8

    key = jax.random.PRNGKey(0)
    kp, kx1, kx2, kxs = jax.random.split(key, 4)

    params = init_nn_params(kp, input_size, layer1_size, layer2_size, output_size)
    fused = fuse_nn_params(params, output_size)

    x1 = jax.random.normal(kx1, (batch, input_size), jnp.float32)
    x2 = jax.random.normal(kx2, (batch, input_size), jnp.float32)
    xs = jax.random.normal(kxs, (batch, input_size), jnp.float32)

    a_dist0, a_dist1, value = nn_forward(fused, x1, x2, xs, output_size=output_size)
    jax.block_until_ready((a_dist0, a_dist1, value))

    # lightweight correctness check against a pure-JAX reference
    ref0 = _reference_head(x1, params["policy0"], True)
    ref1 = _reference_head(x2, params["policy1"], True)
    refv = _reference_head(xs, params["value"], False)
    assert a_dist0.shape == (batch, output_size)
    assert a_dist1.shape == (batch, output_size)
    assert value.shape == (batch, 1)
    # policy heads use the approximate (EUP) reciprocal -> slightly looser tolerance
    assert jnp.allclose(a_dist0, ref0, atol=2e-3, rtol=2e-3)
    assert jnp.allclose(a_dist1, ref1, atol=2e-3, rtol=2e-3)
    assert jnp.allclose(value, refv, atol=1e-4, rtol=1e-4)

    print("KERNEL_OK")
</pallas_src>

<mosaic_0001>
module attributes {stable_mosaic.version = 11 : i64} {
  func.func @_nn_kernel(%arg0: i32, %arg1: memref<3x8x32xf32, #tpu.memory_space<vmem>>, %arg2: memref<3x32x64xf32, #tpu.memory_space<vmem>>, %arg3: memref<3x1x64xf32, #tpu.memory_space<vmem>>, %arg4: memref<3x64x32xf32, #tpu.memory_space<vmem>>, %arg5: memref<3x1x32xf32, #tpu.memory_space<vmem>>, %arg6: memref<3x32x128xf32, #tpu.memory_space<vmem>>, %arg7: memref<3x1x128xf32, #tpu.memory_space<vmem>>, %arg8: memref<8x128xf32, #tpu.memory_space<vmem>>) attributes {dimension_semantics = [#tpu.dimension_semantics<parallel>], iteration_bounds = array<i64: 1>, scalar_prefetch = 0 : i64, scratch_operands = 0 : i64, tpu.core_type = #tpu.core_type<tc>, window_params = [{transform_indices = @transform_0, window_bounds = array<i64: 3, 8, 32>}, {pipeline_mode = #tpu.pipeline_mode<synchronous>, transform_indices = @transform_1, window_bounds = array<i64: 3, 32, 64>}, {pipeline_mode = #tpu.pipeline_mode<synchronous>, transform_indices = @transform_2, window_bounds = array<i64: 3, 1, 64>}, {pipeline_mode = #tpu.pipeline_mode<synchronous>, transform_indices = @transform_3, window_bounds = array<i64: 3, 64, 32>}, {pipeline_mode = #tpu.pipeline_mode<synchronous>, transform_indices = @transform_4, window_bounds = array<i64: 3, 1, 32>}, {pipeline_mode = #tpu.pipeline_mode<synchronous>, transform_indices = @transform_5, window_bounds = array<i64: 3, 32, 128>}, {pipeline_mode = #tpu.pipeline_mode<synchronous>, transform_indices = @transform_6, window_bounds = array<i64: 3, 1, 128>}, {transform_indices = @transform_7, window_bounds = array<i64: 8, 128>}]} {
    %cst = arith.constant 0.000000e+00 : f32
    %0 = vector.broadcast %cst : f32 to vector<8x128xf32>
    %c0 = arith.constant 0 : index
    %c0_0 = arith.constant 0 : index
    %c0_1 = arith.constant 0 : index
    %1 = vector.load %arg1[%c0, %c0_0, %c0_1] : memref<3x8x32xf32, #tpu.memory_space<vmem>>, vector<1x8x32xf32>
    %2 = vector.shape_cast %1 : vector<1x8x32xf32> to vector<8x32xf32>
    %c0_2 = arith.constant 0 : index
    %c0_3 = arith.constant 0 : index
    %c0_4 = arith.constant 0 : index
    %3 = vector.load %arg2[%c0_2, %c0_3, %c0_4] : memref<3x32x64xf32, #tpu.memory_space<vmem>>, vector<1x32x64xf32>
    %4 = vector.shape_cast %3 : vector<1x32x64xf32> to vector<32x64xf32>
    %cst_5 = arith.constant dense<0.000000e+00> : vector<8x64xf32>
    %5 = tpu.matmul %2, %4, %cst_5 {dimension_numbers = #tpu.dot_dimension_numbers<[1], [0], [0], [1], [0, 0, 1, 1], [], []>} : vector<8x32xf32>, vector<32x64xf32>, vector<8x64xf32> -> vector<8x64xf32>
    %c0_6 = arith.constant 0 : index
    %c0_7 = arith.constant 0 : index
    %c0_8 = arith.constant 0 : index
    %6 = vector.load %arg3[%c0_6, %c0_7, %c0_8] : memref<3x1x64xf32, #tpu.memory_space<vmem>>, vector<1x1x64xf32>
    %7 = vector.shape_cast %6 : vector<1x1x64xf32> to vector<1x64xf32>
    %8 = vector.broadcast %7 : vector<1x64xf32> to vector<8x64xf32>
    %9 = arith.addf %5, %8 : vector<8x64xf32>
    %cst_9 = arith.constant 0.000000e+00 : f32
    %10 = vector.broadcast %cst_9 : f32 to vector<8x64xf32>
    %11 = arith.maximumf %9, %10 : vector<8x64xf32>
    %c0_10 = arith.constant 0 : index
    %c0_11 = arith.constant 0 : index
    %c0_12 = arith.constant 0 : index
    %12 = vector.load %arg4[%c0_10, %c0_11, %c0_12] : memref<3x64x32xf32, #tpu.memory_space<vmem>>, vector<1x64x32xf32>
    %13 = vector.shape_cast %12 : vector<1x64x32xf32> to vector<64x32xf32>
    %cst_13 = arith.constant dense<0.000000e+00> : vector<8x32xf32>
    %14 = tpu.matmul %11, %13, %cst_13 {dimension_numbers = #tpu.dot_dimension_numbers<[1], [0], [0], [1], [0, 0, 1, 1], [], []>} : vector<8x64xf32>, vector<64x32xf32>, vector<8x32xf32> -> vector<8x32xf32>
    %c0_14 = arith.constant 0 : index
    %c0_15 = arith.constant 0 : index
    %c0_16 = arith.constant 0 : index
    %15 = vector.load %arg5[%c0_14, %c0_15, %c0_16] : memref<3x1x32xf32, #tpu.memory_space<vmem>>, vector<1x1x32xf32>
    %16 = vector.shape_cast %15 : vector<1x1x32xf32> to vector<1x32xf32>
    %17 = vector.broadcast %16 : vector<1x32xf32> to vector<8x32xf32>
    %18 = arith.addf %14, %17 : vector<8x32xf32>
    %cst_17 = arith.constant 0.000000e+00 : f32
    %19 = vector.broadcast %cst_17 : f32 to vector<8x32xf32>
    %20 = arith.maximumf %18, %19 : vector<8x32xf32>
    %c0_18 = arith.constant 0 : index
    %c0_19 = arith.constant 0 : index
    %c0_20 = arith.constant 0 : index
    %21 = vector.load %arg6[%c0_18, %c0_19, %c0_20] : memref<3x32x128xf32, #tpu.memory_space<vmem>>, vector<1x32x128xf32>
    %22 = vector.shape_cast %21 : vector<1x32x128xf32> to vector<32x128xf32>
    %cst_21 = arith.constant dense<0.000000e+00> : vector<8x128xf32>
    %23 = tpu.matmul %20, %22, %cst_21 {dimension_numbers = #tpu.dot_dimension_numbers<[1], [0], [0], [1], [0, 0, 1, 1], [], []>} : vector<8x32xf32>, vector<32x128xf32>, vector<8x128xf32> -> vector<8x128xf32>
    %c0_22 = arith.constant 0 : index
    %c0_23 = arith.constant 0 : index
    %c0_24 = arith.constant 0 : index
    %24 = vector.load %arg7[%c0_22, %c0_23, %c0_24] : memref<3x1x128xf32, #tpu.memory_space<vmem>>, vector<1x1x128xf32>
    %25 = vector.shape_cast %24 : vector<1x1x128xf32> to vector<1x128xf32>
    %26 = vector.broadcast %25 : vector<1x128xf32> to vector<8x128xf32>
    %27 = arith.addf %23, %26 : vector<8x128xf32>
    %cst_25 = arith.constant dense<0xFF800000> : vector<8xf32>
    %28 = vector.multi_reduction <maximumf>, %27, %cst_25 [1] : vector<8x128xf32> to vector<8xf32>
    %29 = vector.shape_cast %28 : vector<8xf32> to vector<8x1xf32>
    %30 = vector.broadcast %29 : vector<8x1xf32> to vector<8x128xf32>
    %31 = arith.subf %27, %30 : vector<8x128xf32>
    %32 = math.exp %31 : vector<8x128xf32>
    %cst_26 = arith.constant dense<0.000000e+00> : vector<8xf32>
    %33 = vector.multi_reduction <add>, %32, %cst_26 [1] : vector<8x128xf32> to vector<8xf32>
    %34 = vector.shape_cast %33 : vector<8xf32> to vector<8x1xf32>
    %35 = tpu.reciprocal %34 {approx = true} : vector<8x1xf32> -> vector<8x1xf32>
    %36 = vector.broadcast %35 : vector<8x1xf32> to vector<8x128xf32>
    %37 = arith.mulf %32, %36 : vector<8x128xf32>
    %38 = arith.addf %0, %37 : vector<8x128xf32>
    %c1 = arith.constant 1 : index
    %c0_27 = arith.constant 0 : index
    %c0_28 = arith.constant 0 : index
    %39 = vector.load %arg1[%c1, %c0_27, %c0_28] : memref<3x8x32xf32, #tpu.memory_space<vmem>>, vector<1x8x32xf32>
    %40 = vector.shape_cast %39 : vector<1x8x32xf32> to vector<8x32xf32>
    %c1_29 = arith.constant 1 : index
    %c0_30 = arith.constant 0 : index
    %c0_31 = arith.constant 0 : index
    %41 = vector.load %arg2[%c1_29, %c0_30, %c0_31] : memref<3x32x64xf32, #tpu.memory_space<vmem>>, vector<1x32x64xf32>
    %42 = vector.shape_cast %41 : vector<1x32x64xf32> to vector<32x64xf32>
    %cst_32 = arith.constant dense<0.000000e+00> : vector<8x64xf32>
    %43 = tpu.matmul %40, %42, %cst_32 {dimension_numbers = #tpu.dot_dimension_numbers<[1], [0], [0], [1], [0, 0, 1, 1], [], []>} : vector<8x32xf32>, vector<32x64xf32>, vector<8x64xf32> -> vector<8x64xf32>
    %c1_33 = arith.constant 1 : index
    %c0_34 = arith.constant 0 : index
    %c0_35 = arith.constant 0 : index
    %44 = vector.load %arg3[%c1_33, %c0_34, %c0_35] : memref<3x1x64xf32, #tpu.memory_space<vmem>>, vector<1x1x64xf32>
    %45 = vector.shape_cast %44 : vector<1x1x64xf32> to vector<1x64xf32>
    %46 = vector.broadcast %45 : vector<1x64xf32> to vector<8x64xf32>
    %47 = arith.addf %43, %46 : vector<8x64xf32>
    %cst_36 = arith.constant 0.000000e+00 : f32
    %48 = vector.broadcast %cst_36 : f32 to vector<8x64xf32>
    %49 = arith.maximumf %47, %48 : vector<8x64xf32>
    %c1_37 = arith.constant 1 : index
    %c0_38 = arith.constant 0 : index
    %c0_39 = arith.constant 0 : index
    %50 = vector.load %arg4[%c1_37, %c0_38, %c0_39] : memref<3x64x32xf32, #tpu.memory_space<vmem>>, vector<1x64x32xf32>
    %51 = vector.shape_cast %50 : vector<1x64x32xf32> to vector<64x32xf32>
    %cst_40 = arith.constant dense<0.000000e+00> : vector<8x32xf32>
    %52 = tpu.matmul %49, %51, %cst_40 {dimension_numbers = #tpu.dot_dimension_numbers<[1], [0], [0], [1], [0, 0, 1, 1], [], []>} : vector<8x64xf32>, vector<64x32xf32>, vector<8x32xf32> -> vector<8x32xf32>
    %c1_41 = arith.constant 1 : index
    %c0_42 = arith.constant 0 : index
    %c0_43 = arith.constant 0 : index
    %53 = vector.load %arg5[%c1_41, %c0_42, %c0_43] : memref<3x1x32xf32, #tpu.memory_space<vmem>>, vector<1x1x32xf32>
    %54 = vector.shape_cast %53 : vector<1x1x32xf32> to vector<1x32xf32>
    %55 = vector.broadcast %54 : vector<1x32xf32> to vector<8x32xf32>
    %56 = arith.addf %52, %55 : vector<8x32xf32>
    %cst_44 = arith.constant 0.000000e+00 : f32
    %57 = vector.broadcast %cst_44 : f32 to vector<8x32xf32>
    %58 = arith.maximumf %56, %57 : vector<8x32xf32>
    %c1_45 = arith.constant 1 : index
    %c0_46 = arith.constant 0 : index
    %c0_47 = arith.constant 0 : index
    %59 = vector.load %arg6[%c1_45, %c0_46, %c0_47] : memref<3x32x128xf32, #tpu.memory_space<vmem>>, vector<1x32x128xf32>
    %60 = vector.shape_cast %59 : vector<1x32x128xf32> to vector<32x128xf32>
    %cst_48 = arith.constant dense<0.000000e+00> : vector<8x128xf32>
    %61 = tpu.matmul %58, %60, %cst_48 {dimension_numbers = #tpu.dot_dimension_numbers<[1], [0], [0], [1], [0, 0, 1, 1], [], []>} : vector<8x32xf32>, vector<32x128xf32>, vector<8x128xf32> -> vector<8x128xf32>
    %c1_49 = arith.constant 1 : index
    %c0_50 = arith.constant 0 : index
    %c0_51 = arith.constant 0 : index
    %62 = vector.load %arg7[%c1_49, %c0_50, %c0_51] : memref<3x1x128xf32, #tpu.memory_space<vmem>>, vector<1x1x128xf32>
    %63 = vector.shape_cast %62 : vector<1x1x128xf32> to vector<1x128xf32>
    %64 = vector.broadcast %63 : vector<1x128xf32> to vector<8x128xf32>
    %65 = arith.addf %61, %64 : vector<8x128xf32>
    %cst_52 = arith.constant dense<0xFF800000> : vector<8xf32>
    %66 = vector.multi_reduction <maximumf>, %65, %cst_52 [1] : vector<8x128xf32> to vector<8xf32>
    %67 = vector.shape_cast %66 : vector<8xf32> to vector<8x1xf32>
    %68 = vector.broadcast %67 : vector<8x1xf32> to vector<8x128xf32>
    %69 = arith.subf %65, %68 : vector<8x128xf32>
    %70 = math.exp %69 : vector<8x128xf32>
    %cst_53 = arith.constant dense<0.000000e+00> : vector<8xf32>
    %71 = vector.multi_reduction <add>, %70, %cst_53 [1] : vector<8x128xf32> to vector<8xf32>
    %72 = vector.shape_cast %71 : vector<8xf32> to vector<8x1xf32>
    %73 = tpu.reciprocal %72 {approx = true} : vector<8x1xf32> -> vector<8x1xf32>
    %74 = vector.broadcast %73 : vector<8x1xf32> to vector<8x128xf32>
    %75 = arith.mulf %70, %74 : vector<8x128xf32>
    %76 = arith.addf %38, %75 : vector<8x128xf32>
    %c2 = arith.constant 2 : index
    %c0_54 = arith.constant 0 : index
    %c0_55 = arith.constant 0 : index
    %77 = vector.load %arg1[%c2, %c0_54, %c0_55] : memref<3x8x32xf32, #tpu.memory_space<vmem>>, vector<1x8x32xf32>
    %78 = vector.shape_cast %77 : vector<1x8x32xf32> to vector<8x32xf32>
    %c2_56 = arith.constant 2 : index
    %c0_57 = arith.constant 0 : index
    %c0_58 = arith.constant 0 : index
    %79 = vector.load %arg2[%c2_56, %c0_57, %c0_58] : memref<3x32x64xf32, #tpu.memory_space<vmem>>, vector<1x32x64xf32>
    %80 = vector.shape_cast %79 : vector<1x32x64xf32> to vector<32x64xf32>
    %cst_59 = arith.constant dense<0.000000e+00> : vector<8x64xf32>
    %81 = tpu.matmul %78, %80, %cst_59 {dimension_numbers = #tpu.dot_dimension_numbers<[1], [0], [0], [1], [0, 0, 1, 1], [], []>} : vector<8x32xf32>, vector<32x64xf32>, vector<8x64xf32> -> vector<8x64xf32>
    %c2_60 = arith.constant 2 : index
    %c0_61 = arith.constant 0 : index
    %c0_62 = arith.constant 0 : index
    %82 = vector.load %arg3[%c2_60, %c0_61, %c0_62] : memref<3x1x64xf32, #tpu.memory_space<vmem>>, vector<1x1x64xf32>
    %83 = vector.shape_cast %82 : vector<1x1x64xf32> to vector<1x64xf32>
    %84 = vector.broadcast %83 : vector<1x64xf32> to vector<8x64xf32>
    %85 = arith.addf %81, %84 : vector<8x64xf32>
    %cst_63 = arith.constant 0.000000e+00 : f32
    %86 = vector.broadcast %cst_63 : f32 to vector<8x64xf32>
    %87 = arith.maximumf %85, %86 : vector<8x64xf32>
    %c2_64 = arith.constant 2 : index
    %c0_65 = arith.constant 0 : index
    %c0_66 = arith.constant 0 : index
    %88 = vector.load %arg4[%c2_64, %c0_65, %c0_66] : memref<3x64x32xf32, #tpu.memory_space<vmem>>, vector<1x64x32xf32>
    %89 = vector.shape_cast %88 : vector<1x64x32xf32> to vector<64x32xf32>
    %cst_67 = arith.constant dense<0.000000e+00> : vector<8x32xf32>
    %90 = tpu.matmul %87, %89, %cst_67 {dimension_numbers = #tpu.dot_dimension_numbers<[1], [0], [0], [1], [0, 0, 1, 1], [], []>} : vector<8x64xf32>, vector<64x32xf32>, vector<8x32xf32> -> vector<8x32xf32>
    %c2_68 = arith.constant 2 : index
    %c0_69 = arith.constant 0 : index
    %c0_70 = arith.constant 0 : index
    %91 = vector.load %arg5[%c2_68, %c0_69, %c0_70] : memref<3x1x32xf32, #tpu.memory_space<vmem>>, vector<1x1x32xf32>
    %92 = vector.shape_cast %91 : vector<1x1x32xf32> to vector<1x32xf32>
    %93 = vector.broadcast %92 : vector<1x32xf32> to vector<8x32xf32>
    %94 = arith.addf %90, %93 : vector<8x32xf32>
    %cst_71 = arith.constant 0.000000e+00 : f32
    %95 = vector.broadcast %cst_71 : f32 to vector<8x32xf32>
    %96 = arith.maximumf %94, %95 : vector<8x32xf32>
    %c2_72 = arith.constant 2 : index
    %c0_73 = arith.constant 0 : index
    %c0_74 = arith.constant 0 : index
    %97 = vector.load %arg6[%c2_72, %c0_73, %c0_74] : memref<3x32x128xf32, #tpu.memory_space<vmem>>, vector<1x32x128xf32>
    %98 = vector.shape_cast %97 : vector<1x32x128xf32> to vector<32x128xf32>
    %cst_75 = arith.constant dense<0.000000e+00> : vector<8x128xf32>
    %99 = tpu.matmul %96, %98, %cst_75 {dimension_numbers = #tpu.dot_dimension_numbers<[1], [0], [0], [1], [0, 0, 1, 1], [], []>} : vector<8x32xf32>, vector<32x128xf32>, vector<8x128xf32> -> vector<8x128xf32>
    %c2_76 = arith.constant 2 : index
    %c0_77 = arith.constant 0 : index
    %c0_78 = arith.constant 0 : index
    %100 = vector.load %arg7[%c2_76, %c0_77, %c0_78] : memref<3x1x128xf32, #tpu.memory_space<vmem>>, vector<1x1x128xf32>
    %101 = vector.shape_cast %100 : vector<1x1x128xf32> to vector<1x128xf32>
    %102 = vector.broadcast %101 : vector<1x128xf32> to vector<8x128xf32>
    %103 = arith.addf %99, %102 : vector<8x128xf32>
    %104 = arith.addf %76, %103 : vector<8x128xf32>
    %c0_79 = arith.constant 0 : index
    %c0_80 = arith.constant 0 : index
    %105 = vector.load %arg8[%c0_79, %c0_80] : memref<8x128xf32, #tpu.memory_space<vmem>>, vector<8x128xf32>
    tpu.vector_store %arg8[%c0_79, %c0_80], %104 {strides = array<i32>} : memref<8x128xf32, #tpu.memory_space<vmem>>, vector<8x128xf32>,
    return
  }
  func.func @transform_0(%arg0: i32) -> (i32, i32, i32) {
    %c0_i32 = arith.constant 0 : i32
    %c0_i32_0 = arith.constant 0 : i32
    %c0_i32_1 = arith.constant 0 : i32
    return %c0_i32, %arg0, %c0_i32_0 : i32, i32, i32
  }
  func.func @transform_1(%arg0: i32) -> (i32, i32, i32) {
    %c0_i32 = arith.constant 0 : i32
    %c0_i32_0 = arith.constant 0 : i32
    %c0_i32_1 = arith.constant 0 : i32
    %c0_i32_2 = arith.constant 0 : i32
    return %c0_i32, %c0_i32_0, %c0_i32_1 : i32, i32, i32
  }
  func.func @transform_2(%arg0: i32) -> (i32, i32, i32) {
    %c0_i32 = arith.constant 0 : i32
    %c0_i32_0 = arith.constant 0 : i32
    %c0_i32_1 = arith.constant 0 : i32
    %c0_i32_2 = arith.constant 0 : i32
    return %c0_i32, %c0_i32_0, %c0_i32_1 : i32, i32, i32
  }
  func.func @transform_3(%arg0: i32) -> (i32, i32, i32) {
    %c0_i32 = arith.constant 0 : i32
    %c0_i32_0 = arith.constant 0 : i32
    %c0_i32_1 = arith.constant 0 : i32
    %c0_i32_2 = arith.constant 0 : i32
    return %c0_i32, %c0_i32_0, %c0_i32_1 : i32, i32, i32
  }
  func.func @transform_4(%arg0: i32) -> (i32, i32, i32) {
    %c0_i32 = arith.constant 0 : i32
    %c0_i32_0 = arith.constant 0 : i32
    %c0_i32_1 = arith.constant 0 : i32
    %c0_i32_2 = arith.constant 0 : i32
    return %c0_i32, %c0_i32_0, %c0_i32_1 : i32, i32, i32
  }
  func.func @transform_5(%arg0: i32) -> (i32, i32, i32) {
    %c0_i32 = arith.constant 0 : i32
    %c0_i32_0 = arith.constant 0 : i32
    %c0_i32_1 = arith.constant 0 : i32
    %c0_i32_2 = arith.constant 0 : i32
    return %c0_i32, %c0_i32_0, %c0_i32_1 : i32, i32, i32
  }
  func.func @transform_6(%arg0: i32) -> (i32, i32, i32) {
    %c0_i32 = arith.constant 0 : i32
    %c0_i32_0 = arith.constant 0 : i32
    %c0_i32_1 = arith.constant 0 : i32
    %c0_i32_2 = arith.constant 0 : i32
    return %c0_i32, %c0_i32_0, %c0_i32_1 : i32, i32, i32
  }
  func.func @transform_7(%arg0: i32) -> (i32, i32) {
    %c0_i32 = arith.constant 0 : i32
    %c0_i32_0 = arith.constant 0 : i32
    return %arg0, %c0_i32 : i32, i32
  }
}

</mosaic_0001>

<llo_original>
// kernel: nn_forward_stacked.1
$region0: #{nn_forward_stacked.1}
  #allocation0 [shape = 'u32[]', space=smem, size = 0x4, offset = 0x4, fixed_abs, tag = 'smem constant byte address 0x4 - core index']
  #allocation1 [shape = 'u32[72,128]{1,0:T(1,128)}', space=vmem, size = 0x9000, scoped, tag = 'internal scratch']
  %s0 = inlined_call_operand.vmem [shape: f32[3,8,32], index: 0, kind: input, shape index: {}]
  %s1 = inlined_call_operand.vmem [shape: f32[3,32,64], index: 1, kind: input, shape index: {}]
  %s2 = inlined_call_operand.vmem [shape: f32[3,1,64], index: 2, kind: input, shape index: {}]
  %s3 = inlined_call_operand.vmem [shape: f32[3,64,32], index: 3, kind: input, shape index: {}]
  %s4 = inlined_call_operand.vmem [shape: f32[3,1,32], index: 4, kind: input, shape index: {}]
  %s5 = inlined_call_operand.vmem [shape: f32[3,32,128], index: 5, kind: input, shape index: {}]
  %s6 = inlined_call_operand.vmem [shape: f32[3,1,128], index: 6, kind: input, shape index: {}]
  %s7 = inlined_call_operand.hbm [shape: f32[8,128], index: 7, kind: output, shape index: {}]
  %s8 = sld [smem:[#allocation0]]
  $region38: #{nn_forward_stacked.1} parent=0
    _
  %s10 = ssub.s32 1, %s8
  %s11 = scalar_select 0, %s10, %s8
  $region1: #{nn_forward_stacked.1} parent=0
    #allocation2 [shape = 'u8[4096]{0}', space=vmem, size = 0x1000, scoped, tag = 'output window, operand 0, single buffered']
    #allocation3 [shape = 's32[1]{0}', space=sflag, size = 0x4, scoped, tag = 'scoped memory for nn_forward_stacked.1']
    %12 = vsyncpa [#allocation3], 0
    // Predicated region
    $region2: #{nn_forward_stacked.1} parent=1 // pred_check
      _
    $region3: #{nn_forward_stacked.1} parent=1 // pred_check_branch
      %14 = sbr.rel (0) target = $region5
    $region4: #{nn_forward_stacked.1} parent=1 // pred_region
      _
    $region5: #{nn_forward_stacked.1} parent=1 // pred_fallthru
      _
    // Predicated region
    $region6: #{nn_forward_stacked.1} parent=1 // pred_check
      _
    $region7: #{nn_forward_stacked.1} parent=1 // pred_check_branch
      %16 = sbr.rel (0) target = $region9
    $region8: #{nn_forward_stacked.1} parent=1 // pred_region
      _
    $region9: #{nn_forward_stacked.1} parent=1 // pred_fallthru
      _
    // Predicated region
    $region10: #{nn_forward_stacked.1} parent=1 // pred_check
      _
    $region11: #{nn_forward_stacked.1} parent=1 // pred_check_branch
      %18 = sbr.rel (0) target = $region13
    $region12: #{nn_forward_stacked.1} parent=1 // pred_region
      _
    $region13: #{nn_forward_stacked.1} parent=1 // pred_fallthru
      _
    // Predicated region
    $region14: #{nn_forward_stacked.1} parent=1 // pred_check
      _
    $region15: #{nn_forward_stacked.1} parent=1 // pred_check_branch
      %20 = sbr.rel (0) target = $region17
    $region16: #{nn_forward_stacked.1} parent=1 // pred_region
      _
    $region17: #{nn_forward_stacked.1} parent=1 // pred_fallthru
      _
    // Predicated region
    $region18: #{nn_forward_stacked.1} parent=1 // pred_check
      _
    $region19: #{nn_forward_stacked.1} parent=1 // pred_check_branch
      %22 = sbr.rel (0) target = $region21
    $region20: #{nn_forward_stacked.1} parent=1 // pred_region
      _
    $region21: #{nn_forward_stacked.1} parent=1 // pred_fallthru
      _
    // Predicated region
    $region22: #{nn_forward_stacked.1} parent=1 // pred_check
      _
    $region23: #{nn_forward_stacked.1} parent=1 // pred_check_branch
      %24 = sbr.rel (0) target = $region25
    $region24: #{nn_forward_stacked.1} parent=1 // pred_region
      _
    $region25: #{nn_forward_stacked.1} parent=1 // pred_fallthru
      _
    // Predicated region
    $region26: #{nn_forward_stacked.1} parent=1 // pred_check
      _
    $region27: #{nn_forward_stacked.1} parent=1 // pred_check_branch
      %26 = sbr.rel (0) target = $region29
    $region28: #{nn_forward_stacked.1} parent=1 // pred_region
      _
    $region29: #{nn_forward_stacked.1} parent=1 // pred_fallthru
      _
    %v27 = vld [vmem:[%s0] sm:$0xff]
    %v28 = vld [vmem:[%s1] sm:$0xff]
    %v29 = vld [vmem:[%s1 + $0x8] sm:$0xff]
    %v30 = vld [vmem:[%s1 + $0x10] sm:$0xff]
    %v31 = vld [vmem:[%s1 + $0x18] sm:$0xff]
    %v32 = vld [vmem:[%s2] sm:$0x1]
    %v34 = vperm.slane %v32, 0
    %vm36 = vcmask 261120
    %v38 = vsel %vm36, %v27, 0
    %40 = vmatpush.msra.mxu0 0.0
    %41 = vmatpush.msra.mxu0 0.0
    %42 = vmatpush.msra.mxu0 0.0
    %43 = vmatpush.msra.mxu0 0.0
    %44 = vmatpush.msra.mxu0 0.0
    %45 = vmatpush.msra.mxu0 0.0
    %46 = vmatpush.msra.mxu0 0.0
    %47 = vmatpush.msra.mxu0 0.0
    %48 = vmatpush.msra.mxu0 0.0
    %49 = vmatpush.msra.mxu0 0.0
    %50 = vmatpush.msra.mxu0 0.0
    %51 = vmatpush.msra.mxu0 0.0
    %52 = vmatpush.msra.mxu0 %v31
    %53 = vmatpush.msra.mxu0 %v30
    %54 = vmatpush.msra.mxu0 %v29
    %55 = vmatpush.msra.mxu0 %v28
    %56 = vmatmul.f32.gmra.mxu0 %v38
    %v57 = vpop.f32.mrf.mxu0
    %v58 = vadd.f32 %v34, %v57
    %59 = vdwg.mxu0
    %v60 = vmax.f32 %v58, 0.0
    %v61 = vld [vmem:[%s3] sm:$0xff]
    %v62 = vld [vmem:[%s3 + $0x8] sm:$0xff]
    %v63 = vld [vmem:[%s3 + $0x10] sm:$0xff]
    %v64 = vld [vmem:[%s3 + $0x18] sm:$0xff]
    %v65 = vld [vmem:[%s3 + $0x20] sm:$0xff]
    %v66 = vld [vmem:[%s3 + $0x28] sm:$0xff]
    %v67 = vld [vmem:[%s3 + $0x30] sm:$0xff]
    %v68 = vld [vmem:[%s3 + $0x38] sm:$0xff]
    %v69 = vld [vmem:[%s4] sm:$0x1]
    %v71 = vperm.slane %v69, 0
    %vm73 = vcmask 523264
    %v75 = vsel %vm73, %v60, 0
    %77 = vmatpush.msra.mxu0 0.0
    %78 = vmatpush.msra.mxu0 0.0
    %79 = vmatpush.msra.mxu0 0.0
    %80 = vmatpush.msra.mxu0 0.0
    %81 = vmatpush.msra.mxu0 0.0
    %82 = vmatpush.msra.mxu0 0.0
    %83 = vmatpush.msra.mxu0 0.0
    %84 = vmatpush.msra.mxu0 0.0
    %85 = vmatpush.msra.mxu0 %v68
    %86 = vmatpush.msra.mxu0 %v67
    %87 = vmatpush.msra.mxu0 %v66
    %88 = vmatpush.msra.mxu0 %v65
    %89 = vmatpush.msra.mxu0 %v64
    %90 = vmatpush.msra.mxu0 %v63
    %91 = vmatpush.msra.mxu0 %v62
    %92 = vmatpush.msra.mxu0 %v61
    %93 = vmatmul.f32.gmra.mxu0 %v75
    %v94 = vpop.f32.mrf.mxu0
    %v95 = vadd.f32 %v71, %v94
    %96 = vdwg.mxu0
    %v97 = vmax.f32 %v95, 0.0
    %v98 = vld [vmem:[%s5] sm:$0xff]
    %v99 = vld [vmem:[%s5 + $0x8] sm:$0xff]
    %v100 = vld [vmem:[%s5 + $0x10] sm:$0xff]
    %v101 = vld [vmem:[%s5 + $0x18] sm:$0xff]
    %v102 = vld [vmem:[%s6] sm:$0x1]
    %v104 = vperm.slane %v102, 0
    %v107 = vsel %vm36, %v97, 0
    %109 = vmatpush.msra.mxu0 0.0
    %110 = vmatpush.msra.mxu0 0.0
    %111 = vmatpush.msra.mxu0 0.0
    %112 = vmatpush.msra.mxu0 0.0
    %113 = vmatpush.msra.mxu0 0.0
    %114 = vmatpush.msra.mxu0 0.0
    %115 = vmatpush.msra.mxu0 0.0
    %116 = vmatpush.msra.mxu0 0.0
    %117 = vmatpush.msra.mxu0 0.0
    %118 = vmatpush.msra.mxu0 0.0
    %119 = vmatpush.msra.mxu0 0.0
    %120 = vmatpush.msra.mxu0 0.0
    %121 = vmatpush.msra.mxu0 %v101
    %122 = vmatpush.msra.mxu0 %v100
    %123 = vmatpush.msra.mxu0 %v99
    %124 = vmatpush.msra.mxu0 %v98
    %125 = vmatmul.f32.gmra.mxu0 %v107
    %v126 = vpop.f32.mrf.mxu0
    %v127 = vadd.f32 %v104, %v126
    %128 = vdwg.mxu0
    %129 = vmax.xlane.f32.xlu0 %v127
    %v130 = vpop.xlane.xlu0 %129
    %v131 = vsub.f32 %v127, %v130
    %v132 = vmul.f32 %v131, 1.442695
    %v133 = vpow.pop %v132
    %134 = vadd.xlane.f32.xlu0 %v133
    %v135 = vpop.xlane.xlu0 %134
    %v136 = vrcp.pop %v135
    %v137 = vmul.f32 %v133, %v136
    %v138 = vadd.f32 %v137, 0.0
    %s139 = scalar_lea.vmem %s0, 8
    %v140 = vld [vmem:[%s139] sm:$0xff]
    %s141 = scalar_lea.vmem %s1, 32
    %v142 = vld [vmem:[%s141] sm:$0xff]
    %v143 = vld [vmem:[%s141 + $0x8] sm:$0xff]
    %v144 = vld [vmem:[%s141 + $0x10] sm:$0xff]
    %v145 = vld [vmem:[%s141 + $0x18] sm:$0xff]
    %s146 = scalar_lea.vmem %s2, 1
    %v147 = vld [vmem:[%s146] sm:$0x1]
    %v149 = vperm.slane %v147, 0
    %v152 = vsel %vm36, %v140, 0
    %154 = vmatpush.msra.mxu0 0.0
    %155 = vmatpush.msra.mxu0 0.0
    %156 = vmatpush.msra.mxu0 0.0
    %157 = vmatpush.msra.mxu0 0.0
    %158 = vmatpush.msra.mxu0 0.0
    %159 = vmatpush.msra.mxu0 0.0
    %160 = vmatpush.msra.mxu0 0.0
    %161 = vmatpush.msra.mxu0 0.0
    %162 = vmatpush.msra.mxu0 0.0
    %163 = vmatpush.msra.mxu0 0.0
    %164 = vmatpush.msra.mxu0 0.0
    %165 = vmatpush.msra.mxu0 0.0
    %166 = vmatpush.msra.mxu0 %v145
    %167 = vmatpush.msra.mxu0 %v144
    %168 = vmatpush.msra.mxu0 %v143
    %169 = vmatpush.msra.mxu0 %v142
    %170 = vmatmul.f32.gmra.mxu0 %v152
    %v171 = vpop.f32.mrf.mxu0
    %v172 = vadd.f32 %v149, %v171
    %173 = vdwg.mxu0
    %v174 = vmax.f32 %v172, 0.0
    %s175 = scalar_lea.vmem %s3, 64
    %v176 = vld [vmem:[%s175] sm:$0xff]
    %v177 = vld [vmem:[%s175 + $0x8] sm:$0xff]
    %v178 = vld [vmem:[%s175 + $0x10] sm:$0xff]
    %v179 = vld [vmem:[%s175 + $0x18] sm:$0xff]
    %v180 = vld [vmem:[%s175 + $0x20] sm:$0xff]
    %v181 = vld [vmem:[%s175 + $0x28] sm:$0xff]
    %v182 = vld [vmem:[%s175 + $0x30] sm:$0xff]
    %v183 = vld [vmem:[%s175 + $0x38] sm:$0xff]
    %s184 = scalar_lea.vmem %s4, 1
    %v185 = vld [vmem:[%s184] sm:$0x1]
    %v187 = vperm.slane %v185, 0
    %v190 = vsel %vm73, %v174, 0
    %192 = vmatpush.msra.mxu0 0.0
    %193 = vmatpush.msra.mxu0 0.0
    %194 = vmatpush.msra.mxu0 0.0
    %195 = vmatpush.msra.mxu0 0.0
    %196 = vmatpush.msra.mxu0 0.0
    %197 = vmatpush.msra.mxu0 0.0
    %198 = vmatpush.msra.mxu0 0.0
    %199 = vmatpush.msra.mxu0 0.0
    %200 = vmatpush.msra.mxu0 %v183
    %201 = vmatpush.msra.mxu0 %v182
    %202 = vmatpush.msra.mxu0 %v181
    %203 = vmatpush.msra.mxu0 %v180
    %204 = vmatpush.msra.mxu0 %v179
    %205 = vmatpush.msra.mxu0 %v178
    %206 = vmatpush.msra.mxu0 %v177
    %207 = vmatpush.msra.mxu0 %v176
    %208 = vmatmul.f32.gmra.mxu0 %v190
    %v209 = vpop.f32.mrf.mxu0
    %v210 = vadd.f32 %v187, %v209
    %211 = vdwg.mxu0
    %v212 = vmax.f32 %v210, 0.0
    %s213 = scalar_lea.vmem %s5, 32
    %v214 = vld [vmem:[%s213] sm:$0xff]
    %v215 = vld [vmem:[%s213 + $0x8] sm:$0xff]
    %v216 = vld [vmem:[%s213 + $0x10] sm:$0xff]
    %v217 = vld [vmem:[%s213 + $0x18] sm:$0xff]
    %s218 = scalar_lea.vmem %s6, 1
    %v219 = vld [vmem:[%s218] sm:$0x1]
    %v221 = vperm.slane %v219, 0
    %v224 = vsel %vm36, %v212, 0
    %226 = vmatpush.msra.mxu0 0.0
    %227 = vmatpush.msra.mxu0 0.0
    %228 = vmatpush.msra.mxu0 0.0
    %229 = vmatpush.msra.mxu0 0.0
    %230 = vmatpush.msra.mxu0 0.0
    %231 = vmatpush.msra.mxu0 0.0
    %232 = vmatpush.msra.mxu0 0.0
    %233 = vmatpush.msra.mxu0 0.0
    %234 = vmatpush.msra.mxu0 0.0
    %235 = vmatpush.msra.mxu0 0.0
    %236 = vmatpush.msra.mxu0 0.0
    %237 = vmatpush.msra.mxu0 0.0
    %238 = vmatpush.msra.mxu0 %v217
    %239 = vmatpush.msra.mxu0 %v216
    %240 = vmatpush.msra.mxu0 %v215
    %241 = vmatpush.msra.mxu0 %v214
    %242 = vmatmul.f32.gmra.mxu0 %v224
    %v243 = vpop.f32.mrf.mxu0
    %v244 = vadd.f32 %v221, %v243
    %245 = vdwg.mxu0
    %246 = vmax.xlane.f32.xlu0 %v244
    %v247 = vpop.xlane.xlu0 %246
    %v248 = vsub.f32 %v244, %v247
    %v249 = vmul.f32 %v248, 1.442695
    %v250 = vpow.pop %v249
    %251 = vadd.xlane.f32.xlu0 %v250
    %v252 = vpop.xlane.xlu0 %251
    %v253 = vrcp.pop %v252
    %v254 = vmul.f32 %v250, %v253
    %v255 = vadd.f32 %v138, %v254
    %s256 = scalar_lea.vmem %s0, 16
    %v257 = vld [vmem:[%s256] sm:$0xff]
    %s258 = scalar_lea.vmem %s1, 64
    %v259 = vld [vmem:[%s258] sm:$0xff]
    %v260 = vld [vmem:[%s258 + $0x8] sm:$0xff]
    %v261 = vld [vmem:[%s258 + $0x10] sm:$0xff]
    %v262 = vld [vmem:[%s258 + $0x18] sm:$0xff]
    %s263 = scalar_lea.vmem %s2, 2
    %v264 = vld [vmem:[%s263] sm:$0x1]
    %v266 = vperm.slane %v264, 0
    %v269 = vsel %vm36, %v257, 0
    %271 = vmatpush.msra.mxu0 0.0
    %272 = vmatpush.msra.mxu0 0.0
    %273 = vmatpush.msra.mxu0 0.0
    %274 = vmatpush.msra.mxu0 0.0
    %275 = vmatpush.msra.mxu0 0.0
    %276 = vmatpush.msra.mxu0 0.0
    %277 = vmatpush.msra.mxu0 0.0
    %278 = vmatpush.msra.mxu0 0.0
    %279 = vmatpush.msra.mxu0 0.0
    %280 = vmatpush.msra.mxu0 0.0
    %281 = vmatpush.msra.mxu0 0.0
    %282 = vmatpush.msra.mxu0 0.0
    %283 = vmatpush.msra.mxu0 %v262
    %284 = vmatpush.msra.mxu0 %v261
    %285 = vmatpush.msra.mxu0 %v260
    %286 = vmatpush.msra.mxu0 %v259
    %287 = vmatmul.f32.gmra.mxu0 %v269
    %v288 = vpop.f32.mrf.mxu0
    %v289 = vadd.f32 %v266, %v288
    %290 = vdwg.mxu0
    %v291 = vmax.f32 %v289, 0.0
    %s292 = scalar_lea.vmem %s3, 128
    %v293 = vld [vmem:[%s292] sm:$0xff]
    %v294 = vld [vmem:[%s292 + $0x8] sm:$0xff]
    %v295 = vld [vmem:[%s292 + $0x10] sm:$0xff]
    %v296 = vld [vmem:[%s292 + $0x18] sm:$0xff]
    %v297 = vld [vmem:[%s292 + $0x20] sm:$0xff]
    %v298 = vld [vmem:[%s292 + $0x28] sm:$0xff]
    %v299 = vld [vmem:[%s292 + $0x30] sm:$0xff]
    %v300 = vld [vmem:[%s292 + $0x38] sm:$0xff]
    %s301 = scalar_lea.vmem %s4, 2
    %v302 = vld [vmem:[%s301] sm:$0x1]
    %v304 = vperm.slane %v302, 0
    %v307 = vsel %vm73, %v291, 0
    %309 = vmatpush.msra.mxu0 0.0
    %310 = vmatpush.msra.mxu0 0.0
    %311 = vmatpush.msra.mxu0 0.0
    %312 = vmatpush.msra.mxu0 0.0
    %313 = vmatpush.msra.mxu0 0.0
    %314 = vmatpush.msra.mxu0 0.0
    %315 = vmatpush.msra.mxu0 0.0
    %316 = vmatpush.msra.mxu0 0.0
    %317 = vmatpush.msra.mxu0 %v300
    %318 = vmatpush.msra.mxu0 %v299
    %319 = vmatpush.msra.mxu0 %v298
    %320 = vmatpush.msra.mxu0 %v297
    %321 = vmatpush.msra.mxu0 %v296
    %322 = vmatpush.msra.mxu0 %v295
    %323 = vmatpush.msra.mxu0 %v294
    %324 = vmatpush.msra.mxu0 %v293
    %325 = vmatmul.f32.gmra.mxu0 %v307
    %v326 = vpop.f32.mrf.mxu0
    %v327 = vadd.f32 %v304, %v326
    %328 = vdwg.mxu0
    %v329 = vmax.f32 %v327, 0.0
    %s330 = scalar_lea.vmem %s5, 64
    %v331 = vld [vmem:[%s330] sm:$0xff]
    %v332 = vld [vmem:[%s330 + $0x8] sm:$0xff]
    %v333 = vld [vmem:[%s330 + $0x10] sm:$0xff]
    %v334 = vld [vmem:[%s330 + $0x18] sm:$0xff]
    %s335 = scalar_lea.vmem %s6, 2
    %v336 = vld [vmem:[%s335] sm:$0x1]
    %v338 = vperm.slane %v336, 0
    %v341 = vsel %vm36, %v329, 0
    %343 = vmatpush.msra.mxu0 0.0
    %344 = vmatpush.msra.mxu0 0.0
    %345 = vmatpush.msra.mxu0 0.0
    %346 = vmatpush.msra.mxu0 0.0
    %347 = vmatpush.msra.mxu0 0.0
    %348 = vmatpush.msra.mxu0 0.0
    %349 = vmatpush.msra.mxu0 0.0
    %350 = vmatpush.msra.mxu0 0.0
    %351 = vmatpush.msra.mxu0 0.0
    %352 = vmatpush.msra.mxu0 0.0
    %353 = vmatpush.msra.mxu0 0.0
    %354 = vmatpush.msra.mxu0 0.0
    %355 = vmatpush.msra.mxu0 %v334
    %356 = vmatpush.msra.mxu0 %v333
    %357 = vmatpush.msra.mxu0 %v332
    %358 = vmatpush.msra.mxu0 %v331
    %359 = vmatmul.f32.gmra.mxu0 %v341
    %v360 = vpop.f32.mrf.mxu0
    %v361 = vadd.f32 %v338, %v360
    %362 = vdwg.mxu0
    %v363 = vadd.f32 %v255, %v361
    %364 = vst [vmem:[#allocation2] sm:$0xff] %v363
    // Predicated region
    $region30: #{nn_forward_stacked.1} parent=1 // pred_check
      _
    $region31: #{nn_forward_stacked.1} parent=1 // pred_check_branch
      %366 = sbr.rel (0) target = $region33
    $region32: #{nn_forward_stacked.1} parent=1 // pred_region
      %368 = vsyncadd [#allocation3], 0
      %s370 = sshll.u32 [#allocation2], 4
      %s371 = int_to_ptr.vmem [resolvable:$true] %s370
      %s372 = sshll.u32 %s7, 4
      %s373 = int_to_ptr.hbm [resolvable:$true] %s372
      %375 = dma.vmem_to_hbm [thread:$0]  %s371, 128, %s373, [#allocation3]
    $region33: #{nn_forward_stacked.1} parent=1 // pred_fallthru
      _
    // Predicated region
    $region34: #{nn_forward_stacked.1} parent=1 // pred_check
      _
    $region35: #{nn_forward_stacked.1} parent=1 // pred_check_branch
      %377 = sbr.rel (0) target = $region37
    $region36: #{nn_forward_stacked.1} parent=1 // pred_region
      %379 = dma.done [#allocation3], 128
    $region37: #{nn_forward_stacked.1} parent=1 // pred_fallthru
      _
    %380 = vsyncpa [#allocation3], 1

</llo_original>
